<compile_context>
chip_gen: v6e
topology: v6e:2x2x1
jax: 0.10.0
libtpu: 0.0.40
codegen_flags: <defaults>
</compile_context>

<pallas_src>
import functools

import jax
import jax.numpy as jnp
from jax.experimental import pallas as pl
from jax.experimental.pallas import tpu as pltpu


def _round_up(a, m):
    return (a + m - 1) // m * m


def _vpu_kernel(w_ref, b_ref, x_ref, o_ref, *, C):
    """Small-C path: C full-tile FMAs on the VPU, no MXU, no concat.

    w_ref : (C, C, 1) VMEM, w_ref[c] = W[c, :] as a (C, 1) column.
    b_ref : (C, 1)    VMEM (f32).
    x_ref / o_ref : (1, C, T) VMEM, T a multiple of 128 (lane-dense).
    """
    x = x_ref[0].astype(jnp.float32)                  # (C, T)
    acc = x + b_ref[...].astype(jnp.float32)          # residual + bias, full tile
    for c in range(C):                                # unrolled; C <= 8
        wc = w_ref[c].astype(jnp.float32)             # (C, 1)
        acc = acc + wc * x[c:c + 1, :]                 # (C,1)*(1,T) full-tile FMA
    o_ref[0] = acc.astype(o_ref.dtype)


def _mxu_kernel(wt_ref, b_ref, x_ref, o_ref):
    """Large-C path: single MXU matmul per tile, f32 accumulation.

    wt_ref : (C, C) = W^T resident in VMEM.  b_ref : (C, 1) VMEM (f32).
    """
    x = x_ref[0]                                       # (C, T)
    fx = jnp.dot(wt_ref[...], x, preferred_element_type=jnp.float32)
    fx = fx + b_ref[...].astype(jnp.float32)
    o_ref[0] = (fx + x.astype(jnp.float32)).astype(o_ref.dtype)


def residual_forward(x_nchw, weight, bias, *, vpu_c_threshold=8):
    """Fused Residual(fn)(x) = fn(x) + x with fn = 1x1 conv (channel mix + bias).

    x_nchw : (N, C, H, W)
    weight : (C, C)   input channel -> output channel  (out_o += x_c * W[c, o])
    bias   : (C,)
    """
    N, C, H, W = x_nchw.shape
    hw = H * W
    x3 = x_nchw.reshape(N, C, hw)            # zero-cost reshape; stays NCHW
    lane = 128
    itemsize = jnp.dtype(x3.dtype).itemsize

    # Per-generation VMEM budget (v5e/v6e: 128 MiB physical, v7x: 64 MiB/TC).
    try:
        vmem_cap = int(getattr(pltpu.get_tpu_info(), "vmem_capacity_bytes",
                               64 << 20))
    except Exception:
        vmem_cap = 64 << 20
    vmem_budget = min(vmem_cap * 3 // 4, 96 << 20)

    # Spatial tile sized by bytes: ~4 MiB of x per tile, kept (with the
    # double-buffered in/out tiles and f32 temporaries) inside the VMEM budget.
    bytes_per_col = C * (4 * itemsize + 2 * 4)   # 2x in + 2x out + 2 f32 temps
    t_vmem_cap = max(lane,
                     ((vmem_budget - (4 << 20)) // bytes_per_col) // lane * lane)
    t_target = max(lane, ((4 << 20) // (C * itemsize)) // lane * lane)
    T = min(_round_up(hw, lane), t_target, t_vmem_cap)

    # v7x shards "parallel" grid axes over 2 TensorCores: when N == 1 make
    # sure the spatial axis has at least two tiles.
    if N == 1 and T >= hw and hw > lane:
        T = max(lane, _round_up(pl.cdiv(hw, 2), lane))

    grid = (N, pl.cdiv(hw, T))   # partial last tile: padded reads, masked writes

    use_vpu = C <= vpu_c_threshold
    if use_vpu:
        kernel = functools.partial(_vpu_kernel, C=C)
        w_arg = weight.reshape(C, C, 1)
        w_spec = pl.BlockSpec((C, C, 1), lambda n, j: (0, 0, 0))
    else:
        kernel = _mxu_kernel
        wt = weight.T                                   # tiny one-time transpose
        if x3.dtype == jnp.bfloat16:
            wt = wt.astype(jnp.bfloat16)                # full-rate bf16 MXU
        w_arg = wt
        w_spec = pl.BlockSpec((C, C), lambda n, j: (0, 0))
    b_arg = bias.reshape(C, 1).astype(jnp.float32)
    b_spec = pl.BlockSpec((C, 1), lambda n, j: (0, 0))

    x_spec = pl.BlockSpec((1, C, T), lambda n, j: (n, 0, j))
    o_spec = pl.BlockSpec((1, C, T), lambda n, j: (n, 0, j))

    # VMEM accounting: double-buffered in+out tiles, in-kernel f32 temporaries,
    # resident weight/bias, misc headroom.
    vmem_bytes = (2 * 2 * C * T * itemsize
                  + 2 * C * T * 4
                  + 2 * C * C * 4 + 2 * C * 4
                  + (2 << 20))
    vmem_bytes = int(min(max(vmem_bytes, 4 << 20), vmem_budget))

    cost = pl.CostEstimate(
        flops=2 * N * C * C * hw + 2 * N * C * hw,
        transcendentals=0,
        bytes_accessed=2 * N * C * hw * itemsize + C * C * 4 + C * 4,
    )

    out3 = pl.pallas_call(
        kernel,
        out_shape=jax.ShapeDtypeStruct((N, C, hw), x3.dtype),
        grid_spec=pltpu.PrefetchScalarGridSpec(
            num_scalar_prefetch=0,
            grid=grid,
            in_specs=[w_spec, b_spec, x_spec],
            out_specs=o_spec,
        ),
        compiler_params=pltpu.CompilerParams(
            dimension_semantics=("parallel", "parallel"),
            vmem_limit_bytes=vmem_bytes,
        ),
        cost_estimate=cost,
    )(w_arg, b_arg, x3)

    return out3.reshape(N, C, H, W)


def _ref(x, weight, bias):
    # Pure-JAX reference: fn(x) + x with fn = 1x1 conv, computed in NCHW.
    return (jnp.einsum("nchw,co->nohw", x, weight)
            + bias[None, :, None, None] + x)


if __name__ == "__main__":
    key = jax.random.PRNGKey(0)
    kx, kw, kb = jax.random.split(key, 3)

    # Primary case (small-C VPU path): N=2, C=4, 16x16 spatial.
    N, C, H, W = 2, 4, 16, 16
    x = jax.random.normal(kx, (N, C, H, W), dtype=jnp.float32)
    weight = jax.random.normal(kw, (C, C), dtype=jnp.float32) * 0.1
    bias = jax.random.normal(kb, (C,), dtype=jnp.float32) * 0.1
    out = jax.block_until_ready(residual_forward(x, weight, bias))
    assert out.shape == x.shape and out.dtype == x.dtype
    assert jnp.allclose(out, _ref(x, weight, bias), atol=1e-5, rtol=1e-5)

    # N == 1 (two-tile split) + partial last spatial tile (no host pad/crop).
    x2 = jax.random.normal(kx, (1, 4, 16, 10), dtype=jnp.float32)
    out2 = jax.block_until_ready(residual_forward(x2, weight, bias))
    assert out2.shape == x2.shape
    assert jnp.allclose(out2, _ref(x2, weight, bias), atol=1e-5, rtol=1e-5)

    # Larger-C MXU path (default-precision MXU matmul -> looser tolerance).
    C3 = 16
    w3 = jax.random.normal(kw, (C3, C3), dtype=jnp.float32) * 0.1
    b3 = jax.random.normal(kb, (C3,), dtype=jnp.float32) * 0.1
    x3 = jax.random.normal(kx, (2, C3, 16, 16), dtype=jnp.float32)
    out3 = jax.block_until_ready(residual_forward(x3, w3, b3))
    assert out3.shape == x3.shape
    assert jnp.allclose(out3, _ref(x3, w3, b3), atol=2e-2, rtol=2e-2)

    print("KERNEL_OK")
</pallas_src>

<mosaic_0001>
module attributes {stable_mosaic.version = 11 : i64} {
  func.func @_vpu_kernel(%arg0: i32, %arg1: i32, %arg2: memref<4x4x1xf32, #tpu.memory_space<vmem>>, %arg3: memref<4x1xf32, #tpu.memory_space<vmem>>, %arg4: memref<1x4x256xf32, #tpu.memory_space<vmem>>, %arg5: memref<1x4x256xf32, #tpu.memory_space<vmem>>) attributes {dimension_semantics = [#tpu.dimension_semantics<parallel>, #tpu.dimension_semantics<parallel>], iteration_bounds = array<i64: 2, 1>, scalar_prefetch = 0 : i64, scratch_operands = 0 : i64, tpu.core_type = #tpu.core_type<tc>, window_params = [{pipeline_mode = #tpu.pipeline_mode<synchronous>, transform_indices = @transform_0, window_bounds = array<i64: 4, 4, 1>}, {pipeline_mode = #tpu.pipeline_mode<synchronous>, transform_indices = @transform_1, window_bounds = array<i64: 4, 1>}, {transform_indices = @transform_2, window_bounds = array<i64: 1, 4, 256>}, {transform_indices = @transform_3, window_bounds = array<i64: 1, 4, 256>}]} {
    %c0 = arith.constant 0 : index
    %c0_0 = arith.constant 0 : index
    %c0_1 = arith.constant 0 : index
    %0 = vector.load %arg4[%c0, %c0_0, %c0_1] : memref<1x4x256xf32, #tpu.memory_space<vmem>>, vector<1x4x256xf32>
    %1 = vector.shape_cast %0 : vector<1x4x256xf32> to vector<4x256xf32>
    %c0_2 = arith.constant 0 : index
    %c0_3 = arith.constant 0 : index
    %2 = vector.load %arg3[%c0_2, %c0_3] : memref<4x1xf32, #tpu.memory_space<vmem>>, vector<4x1xf32>
    %3 = vector.broadcast %2 : vector<4x1xf32> to vector<4x256xf32>
    %4 = arith.addf %1, %3 : vector<4x256xf32>
    %c0_4 = arith.constant 0 : index
    %c0_5 = arith.constant 0 : index
    %c0_6 = arith.constant 0 : index
    %5 = vector.load %arg2[%c0_4, %c0_5, %c0_6] : memref<4x4x1xf32, #tpu.memory_space<vmem>>, vector<1x4x1xf32>
    %6 = vector.shape_cast %5 : vector<1x4x1xf32> to vector<4x1xf32>
    %7 = vector.extract_strided_slice %1 {offsets = [0, 0], sizes = [1, 256], strides = [1, 1]} : vector<4x256xf32> to vector<1x256xf32>
    %8 = vector.broadcast %6 : vector<4x1xf32> to vector<4x256xf32>
    %9 = vector.broadcast %7 : vector<1x256xf32> to vector<4x256xf32>
    %10 = arith.mulf %8, %9 : vector<4x256xf32>
    %11 = arith.addf %4, %10 : vector<4x256xf32>
    %c1 = arith.constant 1 : index
    %c0_7 = arith.constant 0 : index
    %c0_8 = arith.constant 0 : index
    %12 = vector.load %arg2[%c1, %c0_7, %c0_8] : memref<4x4x1xf32, #tpu.memory_space<vmem>>, vector<1x4x1xf32>
    %13 = vector.shape_cast %12 : vector<1x4x1xf32> to vector<4x1xf32>
    %14 = vector.extract_strided_slice %1 {offsets = [1, 0], sizes = [1, 256], strides = [1, 1]} : vector<4x256xf32> to vector<1x256xf32>
    %15 = vector.broadcast %13 : vector<4x1xf32> to vector<4x256xf32>
    %16 = vector.broadcast %14 : vector<1x256xf32> to vector<4x256xf32>
    %17 = arith.mulf %15, %16 : vector<4x256xf32>
    %18 = arith.addf %11, %17 : vector<4x256xf32>
    %c2 = arith.constant 2 : index
    %c0_9 = arith.constant 0 : index
    %c0_10 = arith.constant 0 : index
    %19 = vector.load %arg2[%c2, %c0_9, %c0_10] : memref<4x4x1xf32, #tpu.memory_space<vmem>>, vector<1x4x1xf32>
    %20 = vector.shape_cast %19 : vector<1x4x1xf32> to vector<4x1xf32>
    %21 = vector.extract_strided_slice %1 {offsets = [2, 0], sizes = [1, 256], strides = [1, 1]} : vector<4x256xf32> to vector<1x256xf32>
    %22 = vector.broadcast %20 : vector<4x1xf32> to vector<4x256xf32>
    %23 = vector.broadcast %21 : vector<1x256xf32> to vector<4x256xf32>
    %24 = arith.mulf %22, %23 : vector<4x256xf32>
    %25 = arith.addf %18, %24 : vector<4x256xf32>
    %c3 = arith.constant 3 : index
    %c0_11 = arith.constant 0 : index
    %c0_12 = arith.constant 0 : index
    %26 = vector.load %arg2[%c3, %c0_11, %c0_12] : memref<4x4x1xf32, #tpu.memory_space<vmem>>, vector<1x4x1xf32>
    %27 = vector.shape_cast %26 : vector<1x4x1xf32> to vector<4x1xf32>
    %28 = vector.extract_strided_slice %1 {offsets = [3, 0], sizes = [1, 256], strides = [1, 1]} : vector<4x256xf32> to vector<1x256xf32>
    %29 = vector.broadcast %27 : vector<4x1xf32> to vector<4x256xf32>
    %30 = vector.broadcast %28 : vector<1x256xf32> to vector<4x256xf32>
    %31 = arith.mulf %29, %30 : vector<4x256xf32>
    %32 = arith.addf %25, %31 : vector<4x256xf32>
    %c0_13 = arith.constant 0 : index
    %c0_14 = arith.constant 0 : index
    %c0_15 = arith.constant 0 : index
    %33 = vector.load %arg5[%c0_13, %c0_14, %c0_15] : memref<1x4x256xf32, #tpu.memory_space<vmem>>, vector<1x4x256xf32>
    %34 = vector.shape_cast %33 : vector<1x4x256xf32> to vector<4x256xf32>
    %35 = vector.shape_cast %32 : vector<4x256xf32> to vector<1x4x256xf32>
    tpu.vector_store %arg5[%c0_13, %c0_14, %c0_15], %35 {strides = array<i32>} : memref<1x4x256xf32, #tpu.memory_space<vmem>>, vector<1x4x256xf32>,
    return
  }
  func.func @transform_0(%arg0: i32, %arg1: i32) -> (i32, i32, i32) {
    %c0_i32 = arith.constant 0 : i32
    %c0_i32_0 = arith.constant 0 : i32
    %c0_i32_1 = arith.constant 0 : i32
    %c0_i32_2 = arith.constant 0 : i32
    return %c0_i32, %c0_i32_0, %c0_i32_1 : i32, i32, i32
  }
  func.func @transform_1(%arg0: i32, %arg1: i32) -> (i32, i32) {
    %c0_i32 = arith.constant 0 : i32
    %c0_i32_0 = arith.constant 0 : i32
    %c0_i32_1 = arith.constant 0 : i32
    return %c0_i32, %c0_i32_0 : i32, i32
  }
  func.func @transform_2(%arg0: i32, %arg1: i32) -> (i32, i32, i32) {
    %c0_i32 = arith.constant 0 : i32
    %c0_i32_0 = arith.constant 0 : i32
    return %arg0, %c0_i32, %arg1 : i32, i32, i32
  }
  func.func @transform_3(%arg0: i32, %arg1: i32) -> (i32, i32, i32) {
    %c0_i32 = arith.constant 0 : i32
    %c0_i32_0 = arith.constant 0 : i32
    return %arg0, %c0_i32, %arg1 : i32, i32, i32
  }
}

</mosaic_0001>

<llo_original>
// kernel: tpu_custom_call.1
$region0: #{tpu_custom_call.1}
  #allocation0 [shape = 'u32[]', space=smem, size = 0x4, offset = 0x4, fixed_abs, tag = 'smem constant byte address 0x4 - core index']
  #allocation1 [shape = 'u32[144,128]{1,0:T(1,128)}', space=vmem, size = 0x12000, scoped, tag = 'internal scratch']
  %s0 = inlined_call_operand.vmem [shape: f32[4,4,1], index: 0, kind: input, shape index: {}]
  %s1 = inlined_call_operand.vmem [shape: f32[4,1], index: 1, kind: input, shape index: {}]
  %s2 = inlined_call_operand.vmem [shape: f32[2,4,256], index: 2, kind: input, shape index: {}]
  %s3 = inlined_call_operand.hbm [shape: f32[2,4,256], index: 3, kind: output, shape index: {}]
  %s4 = sld [smem:[#allocation0]]
  $region45: #{tpu_custom_call.1} parent=0
    _
  %s6 = ssub.s32 1, %s4
  %s7 = scalar_select 0, %s6, %s4
  $region1: #{tpu_custom_call.1} parent=0
    #allocation2 [shape = 'u8[8192]{0}', space=vmem, size = 0x2000, scoped, tag = 'output window, operand 0']
    #allocation3 [shape = 's32[2]{0}', space=sflag, size = 0x8, scoped, tag = 'scoped memory for tpu_custom_call.1']
    %8 = vsyncpa [#allocation3], 0
    %s9 = scalar_lea.sflag [#allocation3], 1
    %10 = vsyncpa %s9, 0
    loop: start=0, step=1, limit=4
    $region2: #{tpu_custom_call.1} parent=1 // loop_pre_header
      _
    $region3: #{tpu_custom_call.1} parent=1 // loop_header
      %s12 = sphi 0, %s16
      %p13 = scmp.ge.s32.totalorder %s12, 4
      %s19 = sphi 0, %s31
      %s20 = sphi 0, %s27
      %s21 = sphi 0, %s19
      %s22 = sphi 0, %s20
      %s23 = sphi 0, %s21
      %s24 = sphi 0, %s22
      %s32 = sphi 0, %s32
      %s34 = sphi 0, %s32
      %s35 = sphi 0, %s34
      %s49 = sphi 0, %s35
      %s53 = sphi 0, %s53
      %s55 = sphi 0, %s53
      %s56 = sphi 0, %s55
      %s70 = sphi 0, %s56
      %s78 = sphi 0, %s80
      %s81 = sphi 0, %s78
      %s82 = sphi 0, %s81
      %s98 = sphi 0, %s82
      %s106 = sphi 0, %s108
      %s109 = sphi 0, %s106
      %s110 = sphi 0, %s109
      %s126 = sphi 0, %s110
    $region4: #{tpu_custom_call.1} parent=1 // loop_header_branch
      %15 = sbr.rel (%p13) target = $region8
    $region5: #{tpu_custom_call.1} parent=1 // loop_body
      %s17 = ssub.s32 %s12, 1
      %s18 = ssub.s32 %s12, 2
      %s25 = sadd.s32 1, %s20
      %p26 = scmp.ge.s32.totalorder %s25, 1
      %s27 = scalar_select %p26, 0, %s25
      %s28 = sadd.s32 1, %s19
      %s29 = scalar_select %p26, %s28, %s19
      %p30 = scmp.ge.s32.totalorder %s29, 2
      %s31 = scalar_select %p30, 0, %s29
      %s33 = sadd.s32 %s32, 1
      %p36 = scmp.eq.s32.totalorder %s12, 1
      %p37 = scmp.ne.s32.totalorder %s32, %s34
      %p38 = scmp.eq.s32.totalorder %s12, 0
      %p39 = por %p37, %p38
      %p40 = scmp.ne.s32.totalorder %s32, %s34
      %p41 = scmp.eq.s32.totalorder %s17, 1
      %p42 = por %p40, %p41
      %p43 = scmp.ne.s32.totalorder %s34, %s35
      %p44 = scmp.eq.s32.totalorder %s17, 0
      %p45 = por %p43, %p44
      %p46 = scmp.ne.s32.totalorder %s34, %s35
      %p47 = scmp.eq.s32.totalorder %s18, 1
      %p48 = por %p46, %p47
      %p50 = scmp.ne.s32.totalorder %s35, %s49
      %p51 = scmp.eq.s32.totalorder %s18, 0
      %p52 = por %p50, %p51
      %s54 = sadd.s32 %s53, 1
      %p57 = scmp.eq.s32.totalorder %s12, 1
      %p58 = scmp.ne.s32.totalorder %s53, %s55
      %p59 = scmp.eq.s32.totalorder %s12, 0
      %p60 = por %p58, %p59
      %p61 = scmp.ne.s32.totalorder %s53, %s55
      %p62 = scmp.eq.s32.totalorder %s17, 1
      %p63 = por %p61, %p62
      %p64 = scmp.ne.s32.totalorder %s55, %s56
      %p65 = scmp.eq.s32.totalorder %s17, 0
      %p66 = por %p64, %p65
      %p67 = scmp.ne.s32.totalorder %s55, %s56
      %p68 = scmp.eq.s32.totalorder %s18, 1
      %p69 = por %p67, %p68
      %p71 = scmp.ne.s32.totalorder %s56, %s70
      %p72 = scmp.eq.s32.totalorder %s18, 0
      %p73 = por %p71, %p72
      %s74 = ssub.s32 %s19, %s31
      %s75 = ssub.s32 %s20, %s27
      %s76 = sor.u32 %s74, %s75
      %p77 = scmp.eq.s32.totalorder %s76, 0
      %s79 = sadd.s32 %s78, 1
      %s80 = scalar_select %p77, %s78, %s79
      %p83 = pneg %p77
      %p84 = scmp.eq.s32.totalorder %s12, 1
      %p85 = por %p83, %p84
      %p86 = scmp.ne.s32.totalorder %s78, %s81
      %p87 = scmp.eq.s32.totalorder %s12, 0
      %p88 = por %p86, %p87
      %p89 = scmp.ne.s32.totalorder %s78, %s81
      %p90 = scmp.eq.s32.totalorder %s17, 1
      %p91 = por %p89, %p90
      %p92 = scmp.ne.s32.totalorder %s81, %s82
      %p93 = scmp.eq.s32.totalorder %s17, 0
      %p94 = por %p92, %p93
      %p95 = scmp.ne.s32.totalorder %s81, %s82
      %p96 = scmp.eq.s32.totalorder %s18, 1
      %p97 = por %p95, %p96
      %p99 = scmp.ne.s32.totalorder %s82, %s98
      %p100 = scmp.eq.s32.totalorder %s18, 0
      %p101 = por %p99, %p100
      %s102 = ssub.s32 %s19, %s31
      %s103 = ssub.s32 %s20, %s27
      %s104 = sor.u32 %s102, %s103
      %p105 = scmp.eq.s32.totalorder %s104, 0
      %s107 = sadd.s32 %s106, 1
      %s108 = scalar_select %p105, %s106, %s107
      %p111 = pneg %p105
      %p112 = scmp.eq.s32.totalorder %s12, 1
      %p113 = por %p111, %p112
      %p114 = scmp.ne.s32.totalorder %s106, %s109
      %p115 = scmp.eq.s32.totalorder %s12, 0
      %p116 = por %p114, %p115
      %p117 = scmp.ne.s32.totalorder %s106, %s109
      %p118 = scmp.eq.s32.totalorder %s17, 1
      %p119 = por %p117, %p118
      %p120 = scmp.ne.s32.totalorder %s109, %s110
      %p121 = scmp.eq.s32.totalorder %s17, 0
      %p122 = por %p120, %p121
      %p123 = scmp.ne.s32.totalorder %s109, %s110
      %p124 = scmp.eq.s32.totalorder %s18, 1
      %p125 = por %p123, %p124
      %p127 = scmp.ne.s32.totalorder %s110, %s126
      %p128 = scmp.eq.s32.totalorder %s18, 0
      %p129 = por %p127, %p128
      %p130 = scmp.le.s32.totalorder 1, %s12
      %p131 = scmp.lt.s32.totalorder %s12, 3
      %p132 = pnand %p130, %p131
      %p133 = pneg %p132
      // Predicated region
      $region9: #{tpu_custom_call.1} parent=5 // pred_check
        _
      $region10: #{tpu_custom_call.1} parent=5 // pred_check_branch
        %135 = sbr.rel (%p132) target = $region12
      $region11: #{tpu_custom_call.1} parent=5 // pred_region
        %s136 = ssub.s32 %s12, 1
        // Predicated region
        $region13: #{tpu_custom_call.1} parent=11 // pred_check
          %p137 = pneg %p45
        $region14: #{tpu_custom_call.1} parent=11 // pred_check_branch
          %139 = sbr.rel (%p137) target = $region16
        $region15: #{tpu_custom_call.1} parent=11 // pred_region
          _
        $region16: #{tpu_custom_call.1} parent=11 // pred_fallthru
          _
        // Predicated region
        $region17: #{tpu_custom_call.1} parent=11 // pred_check
          %p140 = pneg %p66
        $region18: #{tpu_custom_call.1} parent=11 // pred_check_branch
          %142 = sbr.rel (%p140) target = $region20
        $region19: #{tpu_custom_call.1} parent=11 // pred_region
          _
        $region20: #{tpu_custom_call.1} parent=11 // pred_fallthru
          _
      $region12: #{tpu_custom_call.1} parent=5 // pred_fallthru
        _
      %p143 = scmp.lt.s32.totalorder %s12, 2
      // Predicated region
      $region21: #{tpu_custom_call.1} parent=5 // pred_check
        %p144 = pneg %p143
      $region22: #{tpu_custom_call.1} parent=5 // pred_check_branch
        %146 = sbr.rel (%p144) target = $region24
      $region23: #{tpu_custom_call.1} parent=5 // pred_region
        // Predicated region
        $region25: #{tpu_custom_call.1} parent=23 // pred_check
          %p147 = pneg %p88
        $region26: #{tpu_custom_call.1} parent=23 // pred_check_branch
          %149 = sbr.rel (%p147) target = $region28
        $region27: #{tpu_custom_call.1} parent=23 // pred_region
          %s150 = smul.u32 2, %s20
          %p151 = scmp.lt.s32.totalorder %s19, 1
          %s152 = scalar_select %p151, %s19, 1
          %p153 = scmp.lt.s32.totalorder %s150, 1
          %s154 = scalar_select %p153, %s150, 1
          %s155 = smul.addr %s152, 2
          %s156 = sadd.s32 %s154, %s155
          %s157 = smul.addr %s156, 4
          %s158 = scalar_lea.vmem %s2, %s157
          %s159 = smul.u32 2, %s20
        $region28: #{tpu_custom_call.1} parent=23 // pred_fallthru
          _
      $region24: #{tpu_custom_call.1} parent=5 // pred_fallthru
        _
      %p160 = scmp.le.s32.totalorder 1, %s12
      %p161 = scmp.lt.s32.totalorder %s12, 3
      %p162 = pnand %p160, %p161
      %p163 = pneg %p162
      // Predicated region
      $region29: #{tpu_custom_call.1} parent=5 // pred_check
        _
      $region30: #{tpu_custom_call.1} parent=5 // pred_check_branch
        %165 = sbr.rel (%p162) target = $region32
      $region31: #{tpu_custom_call.1} parent=5 // pred_region
        %s166 = ssub.s32 %s12, 1
        %p167 = pneg %p45
        %p168 = pneg %p42
        %p169 = pneg %p66
        %p170 = pneg %p63
        %s171 = smul.u32 2, %s22
        %p172 = scmp.lt.s32.totalorder %s21, 1
        %s173 = scalar_select %p172, %s21, 1
        %p174 = scmp.lt.s32.totalorder %s171, 1
        %s175 = scalar_select %p174, %s171, 1
        %s176 = smul.addr %s173, 2
        %s177 = sadd.s32 %s175, %s176
        %s178 = smul.addr %s177, 4
        %s179 = scalar_lea.vmem %s2, %s178
        %p180 = pneg %p94
        %p181 = pneg %p91
        %p182 = pneg %p122
        %p183 = pneg %p119
        %s184 = sand.u32 %s109, 1
        %s185 = scalar_lea.sflag [#allocation3], %s184
        %s186 = sand.u32 %s109, 1
        %s187 = smul.addr %s186, 8
        %s188 = scalar_lea.vmem [#allocation2], %s187
        %s189 = smul.u32 2, %s22
        %p190 = scmp.lt.s32.totalorder %s21, 1
        %s191 = scalar_select %p190, %s21, 1
        %p192 = scmp.lt.s32.totalorder %s189, 1
        %s193 = scalar_select %p192, %s189, 1
        %s194 = smul.addr %s191, 2
        %s195 = sadd.s32 %s193, %s194
        %s196 = smul.addr %s195, 4
        %s197 = scalar_lea.vmem %s2, %s196
        %s198 = smul.u32 2, %s22
        %s199 = smul.u32 2, %s22
        %v200 = vld [vmem:[%s197] sm:$0xff]
        %v201 = vld [vmem:[%s1] sm:$0xf]
        %203 = vset.pattern.permute.xlu0 0
        %204 = vperm.xlu0 %203, %v201
        %v205 = vpop.permute.xlu0 %204
        %v207 = vunpack.c.l.s4 839922192
        %v208 = vunpack.c.0.s8 %v207
        %v209 = vlaneseq
        %v210 = vshrl.u32 %v209, 7
        %v211 = vsub.s32 %v208, %v210
        %v212 = vrot.slane %v205, %v211
        %v214 = vadd.f32 %v200, %v212
        %v215 = vld [vmem:[%s0] sm:$0xf]
        %217 = vset.pattern.permute.xlu0 0
        %218 = vperm.xlu0 %217, %v215
        %v219 = vpop.permute.xlu0 %218
        %v222 = vlaneseq
        %v223 = vshrl.u32 %v222, 7
        %v224 = vsub.s32 0, %v223
        %v225 = vrot.slane %v200, %v224
        %v226 = vlaneseq
        %v227 = vshrl.u32 %v226, 7
        %v228 = vsub.s32 4, %v227
        %v229 = vrot.slane %v200, %v228
        %v232 = vlaneseq
        %v233 = vshrl.u32 %v232, 7
        %v234 = vsub.s32 0, %v233
        %v235 = vrot.slane %v225, %v234
        %v236 = vlaneseq
        %v237 = vshrl.u32 %v236, 7
        %v238 = vsub.s32 0, %v237
        %v239 = vrot.slane %v229, %v238
        %v240 = vmul.f32 %v219, %v235
        %v241 = vmul.f32 %v219, %v239
        %v244 = vcombine.low %v240, %v241
        %v246 = vadd.f32 %v214, %v244
        %s247 = scalar_lea.vmem %s0, 4
        %v248 = vld [vmem:[%s247] sm:$0xf]
        %250 = vset.pattern.permute.xlu0 0
        %251 = vperm.xlu0 %250, %v248
        %v252 = vpop.permute.xlu0 %251
        %v254 = vlaneseq
        %v255 = vshrl.u32 %v254, 7
        %v256 = vsub.s32 1, %v255
        %v257 = vrot.slane %v200, %v256
        %v258 = vlaneseq
        %v259 = vshrl.u32 %v258, 7
        %v260 = vsub.s32 5, %v259
        %v261 = vrot.slane %v200, %v260
        %v264 = vlaneseq
        %v265 = vshrl.u32 %v264, 7
        %v266 = vsub.s32 1, %v265
        %v267 = vrot.slane %v257, %v266
        %v268 = vlaneseq
        %v269 = vshrl.u32 %v268, 7
        %v270 = vsub.s32 1, %v269
        %v271 = vrot.slane %v261, %v270
        %v272 = vmul.f32 %v252, %v267
        %v273 = vmul.f32 %v252, %v271
        %v276 = vcombine.low %v272, %v273
        %v278 = vadd.f32 %v246, %v276
        %s279 = scalar_lea.vmem %s0, 8
        %v280 = vld [vmem:[%s279] sm:$0xf]
        %282 = vset.pattern.permute.xlu0 0
        %283 = vperm.xlu0 %282, %v280
        %v284 = vpop.permute.xlu0 %283
        %v286 = vlaneseq
        %v287 = vshrl.u32 %v286, 7
        %v288 = vsub.s32 2, %v287
        %v289 = vrot.slane %v200, %v288
        %v290 = vlaneseq
        %v291 = vshrl.u32 %v290, 7
        %v292 = vsub.s32 6, %v291
        %v293 = vrot.slane %v200, %v292
        %v296 = vlaneseq
        %v297 = vshrl.u32 %v296, 7
        %v298 = vsub.s32 2, %v297
        %v299 = vrot.slane %v289, %v298
        %v300 = vlaneseq
        %v301 = vshrl.u32 %v300, 7
        %v302 = vsub.s32 2, %v301
        %v303 = vrot.slane %v293, %v302
        %v304 = vmul.f32 %v284, %v299
        %v305 = vmul.f32 %v284, %v303
        %v308 = vcombine.low %v304, %v305
        %v310 = vadd.f32 %v278, %v308
        %s311 = scalar_lea.vmem %s0, 12
        %v312 = vld [vmem:[%s311] sm:$0xf]
        %314 = vset.pattern.permute.xlu0 0
        %315 = vperm.xlu0 %314, %v312
        %v316 = vpop.permute.xlu0 %315
        %v318 = vlaneseq
        %v319 = vshrl.u32 %v318, 7
        %v320 = vsub.s32 3, %v319
        %v321 = vrot.slane %v200, %v320
        %v322 = vlaneseq
        %v323 = vshrl.u32 %v322, 7
        %v324 = vsub.s32 7, %v323
        %v325 = vrot.slane %v200, %v324
        %v328 = vlaneseq
        %v329 = vshrl.u32 %v328, 7
        %v330 = vsub.s32 3, %v329
        %v331 = vrot.slane %v321, %v330
        %v332 = vlaneseq
        %v333 = vshrl.u32 %v332, 7
        %v334 = vsub.s32 3, %v333
        %v335 = vrot.slane %v325, %v334
        %v336 = vmul.f32 %v316, %v331
        %v337 = vmul.f32 %v316, %v335
        %v340 = vcombine.low %v336, %v337
        %v342 = vadd.f32 %v310, %v340
        %343 = vst [vmem:[%s188] sm:$0xff] %v342
        %s344 = sand.u32 %s109, 1
        %s345 = scalar_lea.sflag [#allocation3], %s344
        %s346 = sand.u32 %s109, 1
        %s347 = smul.addr %s346, 8
        %s348 = scalar_lea.vmem [#allocation2], %s347
        // Predicated region
        $region33: #{tpu_custom_call.1} parent=31 // pred_check
          %p349 = pneg %p119
        $region34: #{tpu_custom_call.1} parent=31 // pred_check_branch
          %351 = sbr.rel (%p349) target = $region36
        $region35: #{tpu_custom_call.1} parent=31 // pred_region
          %s352 = smul.u32 2, %s22
          %s354 = ssub.s32 128, 128
          %355 = vsyncadd %s345, %s354
          %s356 = smul.addr %s21, 2
          %s357 = sadd.s32 %s352, %s356
          %s358 = smul.addr %s357, 64
          %s359 = scalar_lea.hbm %s3, %s358
          %s361 = sshll.u32 %s348, 4
          %s362 = int_to_ptr.vmem [resolvable:$true] %s361
          %364 = dma.vmem_to_hbm [thread:$0]  %s362, 128, %s359, %s345
        $region36: #{tpu_custom_call.1} parent=31 // pred_fallthru
          _
      $region32: #{tpu_custom_call.1} parent=5 // pred_fallthru
        _
      %p365 = scmp.le.s32.totalorder 2, %s12
      // Predicated region
      $region37: #{tpu_custom_call.1} parent=5 // pred_check
        %p366 = pneg %p365
      $region38: #{tpu_custom_call.1} parent=5 // pred_check_branch
        %368 = sbr.rel (%p366) target = $region40
      $region39: #{tpu_custom_call.1} parent=5 // pred_region
        %s369 = ssub.s32 %s12, 2
        // Predicated region
        $region41: #{tpu_custom_call.1} parent=39 // pred_check
          %p370 = pneg %p125
        $region42: #{tpu_custom_call.1} parent=39 // pred_check_branch
          %372 = sbr.rel (%p370) target = $region44
        $region43: #{tpu_custom_call.1} parent=39 // pred_region
          %s373 = sand.u32 %s110, 1
          %s374 = scalar_lea.sflag [#allocation3], %s373
          %s375 = sand.u32 %s110, 1
          %s376 = smul.addr %s375, 8
          %s377 = scalar_lea.vmem [#allocation2], %s376
          %378 = dma.done %s374, 128
        $region44: #{tpu_custom_call.1} parent=39 // pred_fallthru
          _
      $region40: #{tpu_custom_call.1} parent=5 // pred_fallthru
        _
    $region6: #{tpu_custom_call.1} parent=1 // loop_footer
      %s16 = sadd.s32 1, %s12
    $region7: #{tpu_custom_call.1} parent=1 // loop_footer_branch
      %11 = sbr.rel target = $region3
    $region8: #{tpu_custom_call.1} parent=1 // loop_exit
      _
    %379 = vsyncpa [#allocation3], 1
    %s380 = scalar_lea.sflag [#allocation3], 1
    %381 = vsyncpa %s380, 1

</llo_original>
